<compile_context>
chip_gen: v5e
topology: v5e:2x2
jax: 0.10.0
libtpu: 0.0.40
codegen_flags: <defaults>
</compile_context>

<pallas_src>
import jax
import jax.numpy as jnp
from jax.experimental import pallas as pl
from jax.experimental.pallas import tpu as pltpu

IN_DIM = 784
HID_DIM = 200
OUT_DIM = 1
LN_EPS = 1e-5            # torch.nn.LayerNorm default
LRELU_SLOPE = 0.02
DEFAULT_TB = 2048        # max batch tile (safe under v7x 64 MiB VMEM w/ f32 x)
MIN_GRID_STEPS = 4       # aim for >=4 grid steps so v7x megacore has work


def _round_up(n, m):
    return ((n + m - 1) // m) * m


def _discriminator_kernel(x_ref, w1_ref, b1_ref, gw2_ref, c_ref, o_ref):
    # --- Linear(784 -> 200): one native-bf16 MXU pass, f32 accumulation ------
    x = x_ref[...].astype(jnp.bfloat16)          # in-VMEM cast; no-op if bf16
    h = jnp.dot(x, w1_ref[...],
                preferred_element_type=jnp.float32) + b1_ref[...]   # (TB, 200)

    # --- LeakyReLU(0.02) ------------------------------------------------------
    h = jnp.where(h > 0, h, LRELU_SLOPE * h)

    # --- LayerNorm(200) + Linear(200 -> 1) + Sigmoid, folded ------------------
    #   y      = (h - mean) * rsqrt(var + eps) * gamma + beta
    #   logits = y @ w2 + b2
    #          = rsqrt(var + eps) * sum((h - mean) * (gamma*w2), -1)
    #            + (beta @ w2 + b2)
    mean = jnp.mean(h, axis=-1, keepdims=True)                       # (TB, 1)
    centered = h - mean
    var = jnp.mean(centered * centered, axis=-1, keepdims=True)      # two-pass
    proj = jnp.sum(centered * gw2_ref[...], axis=-1, keepdims=True)  # (TB, 1)
    logits = jax.lax.rsqrt(var + LN_EPS) * proj + c_ref[0, 0]
    o_ref[...] = jax.nn.sigmoid(logits)


def mnist_discriminator_forward(x, params, *, tb=None):
    """x: (B, 784) float32 or bfloat16.  params: dict of w1,b1,gamma,beta,w2,b2."""
    B = x.shape[0]
    if tb is None:
        # Target at least MIN_GRID_STEPS grid steps (keeps both v7x TCs busy),
        # (8,128)-aligned tiles, capped at DEFAULT_TB.
        tb = _round_up(pl.cdiv(max(B, 1), MIN_GRID_STEPS), 8)
        tb = max(8, min(DEFAULT_TB, tb))
    else:
        tb = max(8, _round_up(tb, 8))

    # Pad batch to a multiple of the tile: every block is aligned, padded rows
    # flow harmlessly through the forward pass and are sliced off below.
    b_padded = _round_up(B, tb)
    if b_padded != B:
        x = jnp.pad(x, ((0, b_padded - B), (0, 0)))

    # Parameter prep (all tiny relative to the x stream).
    w1 = params["w1"].astype(jnp.bfloat16)                    # (784, 200) bf16
    b1 = params["b1"].reshape(1, HID_DIM).astype(jnp.float32)  # (1, 200)
    gamma = params["gamma"].reshape(1, HID_DIM).astype(jnp.float32)
    beta = params["beta"].reshape(1, HID_DIM).astype(jnp.float32)
    w2_row = params["w2"].reshape(1, HID_DIM).astype(jnp.float32)  # (200,1)->(1,200)
    b2 = params["b2"].reshape(()).astype(jnp.float32)
    gw2 = gamma * w2_row                                       # folded LN scale * proj
    c = (jnp.sum(beta * w2_row) + b2).reshape(1, 1)            # folded bias -> SMEM

    grid = (b_padded // tb,)
    const2d = lambda shape: pl.BlockSpec(shape, lambda i: (0, 0))

    out = pl.pallas_call(
        _discriminator_kernel,
        out_shape=jax.ShapeDtypeStruct((b_padded, OUT_DIM), jnp.float32),
        grid=grid,
        in_specs=[
            pl.BlockSpec((tb, IN_DIM), lambda i: (i, 0)),       # x: streamed
            const2d((IN_DIM, HID_DIM)),                         # w1 (bf16), resident
            const2d((1, HID_DIM)),                              # b1
            const2d((1, HID_DIM)),                              # gamma*w2
            pl.BlockSpec(memory_space=pltpu.MemorySpace.SMEM),  # folded scalar c
        ],
        out_specs=pl.BlockSpec((tb, OUT_DIM), lambda i: (i, 0)),
        compiler_params=pltpu.CompilerParams(
            dimension_semantics=("parallel",),   # megacore sharding on v7x
            vmem_limit_bytes=48 * 1024 * 1024,   # > v5e 16 MiB default scoped,
        ),                                       # < v7x 64 MiB physical VMEM
    )(x, w1, b1, gw2, c)

    return out[:B]


def init_params(key):
    """Deterministic init mirroring torch.nn.Linear defaults U(-1/sqrt(fan_in), 1/sqrt(fan_in))."""
    k1, k2, k3, k4 = jax.random.split(key, 4)
    bound1 = 1.0 / jnp.sqrt(IN_DIM)
    bound2 = 1.0 / jnp.sqrt(HID_DIM)
    return {
        "w1": jax.random.uniform(k1, (IN_DIM, HID_DIM), jnp.float32,
                                 -bound1, bound1),
        "b1": jax.random.uniform(k2, (1, HID_DIM), jnp.float32,
                                 -bound1, bound1),
        "gamma": jnp.ones((1, HID_DIM), jnp.float32),   # LayerNorm weight init
        "beta": jnp.zeros((1, HID_DIM), jnp.float32),   # LayerNorm bias init
        "w2": jax.random.uniform(k3, (HID_DIM, OUT_DIM), jnp.float32,
                                 -bound2, bound2),
        "b2": jax.random.uniform(k4, (1, OUT_DIM), jnp.float32,
                                 -bound2, bound2),
    }


def _reference_forward(x, p):
    """Pure-f32 reference matching torch.nn semantics."""
    h = x @ p["w1"] + p["b1"]
    h = jnp.where(h > 0, h, LRELU_SLOPE * h)
    mean = jnp.mean(h, axis=-1, keepdims=True)
    var = jnp.mean((h - mean) ** 2, axis=-1, keepdims=True)
    h = (h - mean) / jnp.sqrt(var + LN_EPS) * p["gamma"] + p["beta"]
    return jax.nn.sigmoid(h @ p["w2"] + p["b2"])


if __name__ == "__main__":
    key = jax.random.PRNGKey(0)
    pkey, xkey1, xkey2 = jax.random.split(key, 3)
    params = init_params(pkey)

    # Aligned small batch, f32 input (kernel casts the tile to bf16 in-VMEM).
    # Tolerance is loosened vs. the f32 reference because the 784-wide matmul
    # now uses bf16 operands (f32 accumulation).
    B = 8
    x = jax.random.normal(xkey1, (B, IN_DIM), jnp.float32)
    out = jax.block_until_ready(mnist_discriminator_forward(x, params))
    ref = _reference_forward(x, params)
    assert out.shape == (B, OUT_DIM)
    assert jnp.allclose(out, ref, atol=1e-2, rtol=1e-2), \
        float(jnp.max(jnp.abs(out - ref)))

    # Ragged batch + bf16-producer path: exercises padding and the halved
    # HBM x stream the review recommends for production callers.
    B2 = 5
    x2 = jax.random.normal(xkey2, (B2, IN_DIM), jnp.float32)
    out2 = jax.block_until_ready(
        mnist_discriminator_forward(x2.astype(jnp.bfloat16), params))
    ref2 = _reference_forward(x2, params)
    assert out2.shape == (B2, OUT_DIM)
    assert jnp.allclose(out2, ref2, atol=2e-2, rtol=2e-2), \
        float(jnp.max(jnp.abs(out2 - ref2)))

    print("KERNEL_OK")
</pallas_src>

<mosaic_0001>
module attributes {stable_mosaic.version = 11 : i64} {
  func.func @_discriminator_kernel(%arg0: i32, %arg1: memref<8x784xf32, #tpu.memory_space<vmem>>, %arg2: memref<784x200xbf16, #tpu.memory_space<vmem>>, %arg3: memref<1x200xf32, #tpu.memory_space<vmem>>, %arg4: memref<1x200xf32, #tpu.memory_space<vmem>>, %arg5: memref<1x1xf32, #tpu.memory_space<smem>>, %arg6: memref<8x1xf32, #tpu.memory_space<vmem>>) attributes {dimension_semantics = [#tpu.dimension_semantics<parallel>], iteration_bounds = array<i64: 1>, scalar_prefetch = 0 : i64, scratch_operands = 0 : i64, tpu.core_type = #tpu.core_type<tc>, window_params = [{transform_indices = @transform_0, window_bounds = array<i64: 8, 784>}, {pipeline_mode = #tpu.pipeline_mode<synchronous>, transform_indices = @transform_1, window_bounds = array<i64: 784, 200>}, {pipeline_mode = #tpu.pipeline_mode<synchronous>, transform_indices = @transform_2, window_bounds = array<i64: 1, 200>}, {pipeline_mode = #tpu.pipeline_mode<synchronous>, transform_indices = @transform_3, window_bounds = array<i64: 1, 200>}, {transform_indices = @transform_4, window_bounds = array<i64: 1, 1>}, {transform_indices = @transform_5, window_bounds = array<i64: 8, 1>}]} {
    %c0 = arith.constant 0 : index
    %c0_0 = arith.constant 0 : index
    %0 = vector.load %arg1[%c0, %c0_0] : memref<8x784xf32, #tpu.memory_space<vmem>>, vector<8x784xf32>
    %1 = arith.truncf %0 : vector<8x784xf32> to vector<8x784xbf16>
    %c0_1 = arith.constant 0 : index
    %c0_2 = arith.constant 0 : index
    %2 = vector.load %arg2[%c0_1, %c0_2] : memref<784x200xbf16, #tpu.memory_space<vmem>>, vector<784x200xbf16>
    %cst = arith.constant dense<0.000000e+00> : vector<8x200xf32>
    %3 = tpu.matmul %1, %2, %cst {dimension_numbers = #tpu.dot_dimension_numbers<[1], [0], [0], [1], [0, 0, 1, 1], [], []>} : vector<8x784xbf16>, vector<784x200xbf16>, vector<8x200xf32> -> vector<8x200xf32>
    %c0_3 = arith.constant 0 : index
    %c0_4 = arith.constant 0 : index
    %4 = vector.load %arg3[%c0_3, %c0_4] : memref<1x200xf32, #tpu.memory_space<vmem>>, vector<1x200xf32>
    %5 = vector.broadcast %4 : vector<1x200xf32> to vector<8x200xf32>
    %6 = arith.addf %3, %5 : vector<8x200xf32>
    %cst_5 = arith.constant 0.000000e+00 : f32
    %7 = vector.broadcast %cst_5 : f32 to vector<8x200xf32>
    %8 = arith.cmpf ogt, %6, %7 : vector<8x200xf32>
    %cst_6 = arith.constant 2.000000e-02 : f32
    %9 = vector.broadcast %cst_6 : f32 to vector<8x200xf32>
    %10 = arith.mulf %9, %6 : vector<8x200xf32>
    %11 = arith.select %8, %6, %10 : vector<8x200xi1>, vector<8x200xf32>
    %cst_7 = arith.constant dense<0.000000e+00> : vector<8xf32>
    %12 = vector.multi_reduction <add>, %11, %cst_7 [1] : vector<8x200xf32> to vector<8xf32>
    %13 = vector.shape_cast %12 : vector<8xf32> to vector<8x1xf32>
    %cst_8 = arith.constant 2.000000e+02 : f32
    %14 = vector.broadcast %cst_8 : f32 to vector<8x1xf32>
    %15 = arith.divf %13, %14 : vector<8x1xf32>
    %16 = vector.broadcast %15 : vector<8x1xf32> to vector<8x200xf32>
    %17 = arith.subf %11, %16 : vector<8x200xf32>
    %18 = arith.mulf %17, %17 : vector<8x200xf32>
    %cst_9 = arith.constant dense<0.000000e+00> : vector<8xf32>
    %19 = vector.multi_reduction <add>, %18, %cst_9 [1] : vector<8x200xf32> to vector<8xf32>
    %20 = vector.shape_cast %19 : vector<8xf32> to vector<8x1xf32>
    %cst_10 = arith.constant 2.000000e+02 : f32
    %21 = vector.broadcast %cst_10 : f32 to vector<8x1xf32>
    %22 = arith.divf %20, %21 : vector<8x1xf32>
    %c0_11 = arith.constant 0 : index
    %c0_12 = arith.constant 0 : index
    %23 = vector.load %arg4[%c0_11, %c0_12] : memref<1x200xf32, #tpu.memory_space<vmem>>, vector<1x200xf32>
    %24 = vector.broadcast %23 : vector<1x200xf32> to vector<8x200xf32>
    %25 = arith.mulf %17, %24 : vector<8x200xf32>
    %cst_13 = arith.constant dense<0.000000e+00> : vector<8xf32>
    %26 = vector.multi_reduction <add>, %25, %cst_13 [1] : vector<8x200xf32> to vector<8xf32>
    %27 = vector.shape_cast %26 : vector<8xf32> to vector<8x1xf32>
    %cst_14 = arith.constant 9.99999974E-6 : f32
    %28 = vector.broadcast %cst_14 : f32 to vector<8x1xf32>
    %29 = arith.addf %22, %28 : vector<8x1xf32>
    %30 = math.rsqrt %29 : vector<8x1xf32>
    %31 = arith.mulf %30, %27 : vector<8x1xf32>
    %c0_15 = arith.constant 0 : index
    %c0_16 = arith.constant 0 : index
    %32 = memref.load %arg5[%c0_15, %c0_16] : memref<1x1xf32, #tpu.memory_space<smem>>
    %33 = vector.broadcast %32 : f32 to vector<8x1xf32>
    %34 = arith.addf %31, %33 : vector<8x1xf32>
    %35 = arith.negf %34 : vector<8x1xf32>
    %36 = math.exp %35 : vector<8x1xf32>
    %cst_17 = arith.constant 1.000000e+00 : f32
    %37 = vector.broadcast %cst_17 : f32 to vector<8x1xf32>
    %38 = arith.addf %37, %36 : vector<8x1xf32>
    %39 = arith.divf %37, %38 : vector<8x1xf32>
    %c0_18 = arith.constant 0 : index
    %c0_19 = arith.constant 0 : index
    %40 = vector.load %arg6[%c0_18, %c0_19] : memref<8x1xf32, #tpu.memory_space<vmem>>, vector<8x1xf32>
    tpu.vector_store %arg6[%c0_18, %c0_19], %39 {strides = array<i32>} : memref<8x1xf32, #tpu.memory_space<vmem>>, vector<8x1xf32>,
    return
  }
  func.func @transform_0(%arg0: i32) -> (i32, i32) {
    %c0_i32 = arith.constant 0 : i32
    %c0_i32_0 = arith.constant 0 : i32
    return %arg0, %c0_i32 : i32, i32
  }
  func.func @transform_1(%arg0: i32) -> (i32, i32) {
    %c0_i32 = arith.constant 0 : i32
    %c0_i32_0 = arith.constant 0 : i32
    %c0_i32_1 = arith.constant 0 : i32
    return %c0_i32, %c0_i32_0 : i32, i32
  }
  func.func @transform_2(%arg0: i32) -> (i32, i32) {
    %c0_i32 = arith.constant 0 : i32
    %c0_i32_0 = arith.constant 0 : i32
    %c0_i32_1 = arith.constant 0 : i32
    return %c0_i32, %c0_i32_0 : i32, i32
  }
  func.func @transform_3(%arg0: i32) -> (i32, i32) {
    %c0_i32 = arith.constant 0 : i32
    %c0_i32_0 = arith.constant 0 : i32
    %c0_i32_1 = arith.constant 0 : i32
    return %c0_i32, %c0_i32_0 : i32, i32
  }
  func.func @transform_4(%arg0: i32) -> (i32, i32) {
    %c0_i32 = arith.constant 0 : i32
    %c0_i32_0 = arith.constant 0 : i32
    %c0_i32_1 = arith.constant 0 : i32
    return %c0_i32, %c0_i32_0 : i32, i32
  }
  func.func @transform_5(%arg0: i32) -> (i32, i32) {
    %c0_i32 = arith.constant 0 : i32
    %c0_i32_0 = arith.constant 0 : i32
    return %arg0, %c0_i32 : i32, i32
  }
}

</mosaic_0001>

<llo_original>
// kernel: tpu_custom_call.1
$region0: #{tpu_custom_call.1}
  #allocation0 [shape = 'u32[]', space=smem, size = 0x4, offset = 0x4, fixed_abs, tag = 'smem constant byte address 0x4 - core index']
  #allocation1 [shape = 'u32[72,128]{1,0:T(1,128)}', space=vmem, size = 0x9000, scoped, tag = 'internal scratch']
  #allocation2 [shape = 'f32[1,1]{1,0:T(1,128)S(6)}', space=smem, size = 0x200, scoped, tag = 'scoped memory for tpu_custom_call.1']
  %s0 = inlined_call_operand.vmem [shape: f32[8,784], index: 0, kind: input, shape index: {}]
  %s1 = inlined_call_operand.vmem [shape: bf16[784,200], index: 1, kind: input, shape index: {}]
  %s2 = inlined_call_operand.vmem [shape: f32[1,200], index: 2, kind: input, shape index: {}]
  %s3 = inlined_call_operand.vmem [shape: f32[1,200], index: 3, kind: input, shape index: {}]
  %s4 = inlined_call_operand.<no memory space> [shape: f32[1,1], index: 4, kind: input, shape index: {}]
  %s5 = inlined_call_operand.vmem [shape: f32[8,1], index: 5, kind: output, shape index: {}]
  %s6 = sld [smem:[#allocation0]]
  $region30: #{tpu_custom_call.1} parent=0
    _
  %s8 = ssub.s32 1, %s6
  %s9 = scalar_select 0, %s8, %s6
  %10 = sst [smem:[#allocation2]] %s4
  // Predicated region
  $region2: #{tpu_custom_call.1} parent=0 // pred_check
    _
  $region3: #{tpu_custom_call.1} parent=0 // pred_check_branch
    %12 = sbr.rel (0) target = $region5
  $region4: #{tpu_custom_call.1} parent=0 // pred_region
    _
  $region5: #{tpu_custom_call.1} parent=0 // pred_fallthru
    _
  // Predicated region
  $region6: #{tpu_custom_call.1} parent=0 // pred_check
    _
  $region7: #{tpu_custom_call.1} parent=0 // pred_check_branch
    %14 = sbr.rel (0) target = $region9
  $region8: #{tpu_custom_call.1} parent=0 // pred_region
    _
  $region9: #{tpu_custom_call.1} parent=0 // pred_fallthru
    _
  // Predicated region
  $region10: #{tpu_custom_call.1} parent=0 // pred_check
    _
  $region11: #{tpu_custom_call.1} parent=0 // pred_check_branch
    %16 = sbr.rel (0) target = $region13
  $region12: #{tpu_custom_call.1} parent=0 // pred_region
    _
  $region13: #{tpu_custom_call.1} parent=0 // pred_fallthru
    _
  // Predicated region
  $region14: #{tpu_custom_call.1} parent=0 // pred_check
    _
  $region15: #{tpu_custom_call.1} parent=0 // pred_check_branch
    %18 = sbr.rel (0) target = $region17
  $region16: #{tpu_custom_call.1} parent=0 // pred_region
    _
  $region17: #{tpu_custom_call.1} parent=0 // pred_fallthru
    _
  // Predicated region
  $region18: #{tpu_custom_call.1} parent=0 // pred_check
    _
  $region19: #{tpu_custom_call.1} parent=0 // pred_check_branch
    %20 = sbr.rel (0) target = $region21
  $region20: #{tpu_custom_call.1} parent=0 // pred_region
    _
  $region21: #{tpu_custom_call.1} parent=0 // pred_fallthru
    _
  %v22 = vld [vmem:[%s0] sm:$0xff]
  %v23 = vld [vmem:[%s0 + $0x8] sm:$0xff]
  %v24 = vld [vmem:[%s0 + $0x10] sm:$0xff]
  %v25 = vld [vmem:[%s0 + $0x18] sm:$0xff]
  %v26 = vld [vmem:[%s0 + $0x20] sm:$0xff]
  %v27 = vld [vmem:[%s0 + $0x28] sm:$0xff]
  %v28 = vld [vmem:[%s0 + $0x30] sm:$0xff]
  %v29 = vpack.c.bf16 %v22, %v22
  %v30 = vpack.c.bf16 %v23, %v23
  %v31 = vpack.c.bf16 %v24, %v24
  %v32 = vpack.c.bf16 %v25, %v25
  %v33 = vpack.c.bf16 %v26, %v26
  %v34 = vpack.c.bf16 %v27, %v27
  %v35 = vpack.c.bf16 %v28, %v28
  %v36 = vld [vmem:[%s1] sm:$0xff]
  %v37 = vld [vmem:[%s1 + $0x8] sm:$0xff]
  %v38 = vld [vmem:[%s1 + $0x10] sm:$0xff]
  %v39 = vld [vmem:[%s1 + $0x18] sm:$0xff]
  %v40 = vld [vmem:[%s1 + $0x20] sm:$0xff]
  %v41 = vld [vmem:[%s1 + $0x28] sm:$0xff]
  %v42 = vld [vmem:[%s1 + $0x30] sm:$0xff]
  %v43 = vld [vmem:[%s1 + $0x38] sm:$0xff]
  %v44 = vld [vmem:[%s1 + $0x40] sm:$0xff]
  %v45 = vld [vmem:[%s1 + $0x48] sm:$0xff]
  %v46 = vld [vmem:[%s1 + $0x50] sm:$0xff]
  %v47 = vld [vmem:[%s1 + $0x58] sm:$0xff]
  %v48 = vld [vmem:[%s1 + $0x60] sm:$0xff]
  %v49 = vld [vmem:[%s1 + $0x68] sm:$0xff]
  %v50 = vld [vmem:[%s1 + $0x70] sm:$0xff]
  %v51 = vld [vmem:[%s1 + $0x78] sm:$0xff]
  %v52 = vld [vmem:[%s1 + $0x80] sm:$0xff]
  %v53 = vld [vmem:[%s1 + $0x88] sm:$0xff]
  %v54 = vld [vmem:[%s1 + $0x90] sm:$0xff]
  %v55 = vld [vmem:[%s1 + $0x98] sm:$0xff]
  %v56 = vld [vmem:[%s1 + $0xa0] sm:$0xff]
  %v57 = vld [vmem:[%s1 + $0xa8] sm:$0xff]
  %v58 = vld [vmem:[%s1 + $0xb0] sm:$0xff]
  %v59 = vld [vmem:[%s1 + $0xb8] sm:$0xff]
  %v60 = vld [vmem:[%s1 + $0xc0] sm:$0xff]
  %v61 = vld [vmem:[%s1 + $0xc8] sm:$0xff]
  %v62 = vld [vmem:[%s1 + $0xd0] sm:$0xff]
  %v63 = vld [vmem:[%s1 + $0xd8] sm:$0xff]
  %v64 = vld [vmem:[%s1 + $0xe0] sm:$0xff]
  %v65 = vld [vmem:[%s1 + $0xe8] sm:$0xff]
  %v66 = vld [vmem:[%s1 + $0xf0] sm:$0xff]
  %v67 = vld [vmem:[%s1 + $0xf8] sm:$0xff]
  %v68 = vld [vmem:[%s1 + $0x100] sm:$0xff]
  %v69 = vld [vmem:[%s1 + $0x108] sm:$0xff]
  %v70 = vld [vmem:[%s1 + $0x110] sm:$0xff]
  %v71 = vld [vmem:[%s1 + $0x118] sm:$0xff]
  %v72 = vld [vmem:[%s1 + $0x120] sm:$0xff]
  %v73 = vld [vmem:[%s1 + $0x128] sm:$0xff]
  %v74 = vld [vmem:[%s1 + $0x130] sm:$0xff]
  %v75 = vld [vmem:[%s1 + $0x138] sm:$0xff]
  %v76 = vld [vmem:[%s1 + $0x140] sm:$0xff]
  %v77 = vld [vmem:[%s1 + $0x148] sm:$0xff]
  %v78 = vld [vmem:[%s1 + $0x150] sm:$0xff]
  %v79 = vld [vmem:[%s1 + $0x158] sm:$0xff]
  %v80 = vld [vmem:[%s1 + $0x160] sm:$0xff]
  %v81 = vld [vmem:[%s1 + $0x168] sm:$0xff]
  %v82 = vld [vmem:[%s1 + $0x170] sm:$0xff]
  %v83 = vld [vmem:[%s1 + $0x178] sm:$0xff]
  %v84 = vld [vmem:[%s1 + $0x180] sm:$0xff]
  %v85 = vld [vmem:[%s1 + $0x188] sm:$0xff]
  %v86 = vld [vmem:[%s1 + $0x190] sm:$0xff]
  %v87 = vld [vmem:[%s1 + $0x198] sm:$0xff]
  %v88 = vld [vmem:[%s1 + $0x1a0] sm:$0xff]
  %v89 = vld [vmem:[%s1 + $0x1a8] sm:$0xff]
  %v90 = vld [vmem:[%s1 + $0x1b0] sm:$0xff]
  %v91 = vld [vmem:[%s1 + $0x1b8] sm:$0xff]
  %v92 = vld [vmem:[%s1 + $0x1c0] sm:$0xff]
  %v93 = vld [vmem:[%s1 + $0x1c8] sm:$0xff]
  %v94 = vld [vmem:[%s1 + $0x1d0] sm:$0xff]
  %v95 = vld [vmem:[%s1 + $0x1d8] sm:$0xff]
  %v96 = vld [vmem:[%s1 + $0x1e0] sm:$0xff]
  %v97 = vld [vmem:[%s1 + $0x1e8] sm:$0xff]
  %v98 = vld [vmem:[%s1 + $0x1f0] sm:$0xff]
  %v99 = vld [vmem:[%s1 + $0x1f8] sm:$0xff]
  %v100 = vld [vmem:[%s1 + $0x200] sm:$0xff]
  %v101 = vld [vmem:[%s1 + $0x208] sm:$0xff]
  %v102 = vld [vmem:[%s1 + $0x210] sm:$0xff]
  %v103 = vld [vmem:[%s1 + $0x218] sm:$0xff]
  %v104 = vld [vmem:[%s1 + $0x220] sm:$0xff]
  %v105 = vld [vmem:[%s1 + $0x228] sm:$0xff]
  %v106 = vld [vmem:[%s1 + $0x230] sm:$0xff]
  %v107 = vld [vmem:[%s1 + $0x238] sm:$0xff]
  %v108 = vld [vmem:[%s1 + $0x240] sm:$0xff]
  %v109 = vld [vmem:[%s1 + $0x248] sm:$0xff]
  %v110 = vld [vmem:[%s1 + $0x250] sm:$0xff]
  %v111 = vld [vmem:[%s1 + $0x258] sm:$0xff]
  %v112 = vld [vmem:[%s1 + $0x260] sm:$0xff]
  %v113 = vld [vmem:[%s1 + $0x268] sm:$0xff]
  %v114 = vld [vmem:[%s1 + $0x270] sm:$0xff]
  %v115 = vld [vmem:[%s1 + $0x278] sm:$0xff]
  %v116 = vld [vmem:[%s1 + $0x280] sm:$0xff]
  %v117 = vld [vmem:[%s1 + $0x288] sm:$0xff]
  %v118 = vld [vmem:[%s1 + $0x290] sm:$0xff]
  %v119 = vld [vmem:[%s1 + $0x298] sm:$0xff]
  %v120 = vld [vmem:[%s1 + $0x2a0] sm:$0xff]
  %v121 = vld [vmem:[%s1 + $0x2a8] sm:$0xff]
  %v122 = vld [vmem:[%s1 + $0x2b0] sm:$0xff]
  %v123 = vld [vmem:[%s1 + $0x2b8] sm:$0xff]
  %v124 = vld [vmem:[%s1 + $0x2c0] sm:$0xff]
  %v125 = vld [vmem:[%s1 + $0x2c8] sm:$0xff]
  %v126 = vld [vmem:[%s1 + $0x2d0] sm:$0xff]
  %v127 = vld [vmem:[%s1 + $0x2d8] sm:$0xff]
  %v128 = vld [vmem:[%s1 + $0x2e0] sm:$0xff]
  %v129 = vld [vmem:[%s1 + $0x2e8] sm:$0xff]
  %v130 = vld [vmem:[%s1 + $0x2f0] sm:$0xff]
  %v131 = vld [vmem:[%s1 + $0x2f8] sm:$0xff]
  %v132 = vld [vmem:[%s1 + $0x300] sm:$0xff]
  %v133 = vld [vmem:[%s1 + $0x308] sm:$0xff]
  %v134 = vld [vmem:[%s2] sm:$0x3]
  %v136 = vperm.slane %v134, 0
  %v137 = vperm.slane %v134, 1
  %v238 = vunpack.c.l.b16 %v36
  %v239 = vunpack.c.h.b16 %v36
  %v240 = vunpack.c.l.b16 %v37
  %v241 = vunpack.c.h.b16 %v37
  %v242 = vunpack.c.l.b16 %v38
  %v243 = vunpack.c.h.b16 %v38
  %v244 = vunpack.c.l.b16 %v39
  %v245 = vunpack.c.h.b16 %v39
  %v246 = vunpack.c.l.b16 %v40
  %v247 = vunpack.c.h.b16 %v40
  %v248 = vunpack.c.l.b16 %v41
  %v249 = vunpack.c.h.b16 %v41
  %v250 = vunpack.c.l.b16 %v42
  %v251 = vunpack.c.h.b16 %v42
  %v252 = vunpack.c.l.b16 %v43
  %v253 = vunpack.c.h.b16 %v43
  %v254 = vunpack.c.l.b16 %v44
  %v255 = vunpack.c.h.b16 %v44
  %v256 = vunpack.c.l.b16 %v45
  %v257 = vunpack.c.h.b16 %v45
  %v258 = vunpack.c.l.b16 %v46
  %v259 = vunpack.c.h.b16 %v46
  %v260 = vunpack.c.l.b16 %v47
  %v261 = vunpack.c.h.b16 %v47
  %v262 = vunpack.c.l.b16 %v48
  %v263 = vunpack.c.h.b16 %v48
  %v264 = vunpack.c.l.b16 %v49
  %v265 = vunpack.c.h.b16 %v49
  %v266 = vunpack.c.l.b16 %v50
  %v267 = vunpack.c.h.b16 %v50
  %v268 = vunpack.c.l.b16 %v51
  %v269 = vunpack.c.h.b16 %v51
  %v270 = vunpack.c.l.b16 %v52
  %v271 = vunpack.c.h.b16 %v52
  %v272 = vunpack.c.l.b16 %v53
  %v273 = vunpack.c.h.b16 %v53
  %v274 = vunpack.c.l.b16 %v54
  %v275 = vunpack.c.h.b16 %v54
  %v276 = vunpack.c.l.b16 %v55
  %v277 = vunpack.c.h.b16 %v55
  %v278 = vunpack.c.l.b16 %v56
  %v279 = vunpack.c.h.b16 %v56
  %v280 = vunpack.c.l.b16 %v57
  %v281 = vunpack.c.h.b16 %v57
  %v282 = vunpack.c.l.b16 %v58
  %v283 = vunpack.c.h.b16 %v58
  %v284 = vunpack.c.l.b16 %v59
  %v285 = vunpack.c.h.b16 %v59
  %v286 = vunpack.c.l.b16 %v60
  %v287 = vunpack.c.h.b16 %v60
  %v288 = vunpack.c.l.b16 %v61
  %v289 = vunpack.c.h.b16 %v61
  %v290 = vunpack.c.l.b16 %v62
  %v291 = vunpack.c.h.b16 %v62
  %v292 = vunpack.c.l.b16 %v63
  %v293 = vunpack.c.h.b16 %v63
  %v294 = vunpack.c.l.b16 %v64
  %v295 = vunpack.c.h.b16 %v64
  %v296 = vunpack.c.l.b16 %v65
  %v297 = vunpack.c.h.b16 %v65
  %v298 = vunpack.c.l.b16 %v66
  %v299 = vunpack.c.h.b16 %v66
  %v300 = vunpack.c.l.b16 %v67
  %v301 = vunpack.c.h.b16 %v67
  %v302 = vunpack.c.l.b16 %v68
  %v303 = vunpack.c.h.b16 %v68
  %v304 = vunpack.c.l.b16 %v69
  %v305 = vunpack.c.h.b16 %v69
  %v306 = vunpack.c.l.b16 %v70
  %v307 = vunpack.c.h.b16 %v70
  %v308 = vunpack.c.l.b16 %v71
  %v309 = vunpack.c.h.b16 %v71
  %v310 = vunpack.c.l.b16 %v72
  %v311 = vunpack.c.h.b16 %v72
  %v312 = vunpack.c.l.b16 %v73
  %v313 = vunpack.c.h.b16 %v73
  %v314 = vunpack.c.l.b16 %v74
  %v315 = vunpack.c.h.b16 %v74
  %v316 = vunpack.c.l.b16 %v75
  %v317 = vunpack.c.h.b16 %v75
  %v318 = vunpack.c.l.b16 %v76
  %v319 = vunpack.c.h.b16 %v76
  %v320 = vunpack.c.l.b16 %v77
  %v321 = vunpack.c.h.b16 %v77
  %v322 = vunpack.c.l.b16 %v78
  %v323 = vunpack.c.h.b16 %v78
  %v324 = vunpack.c.l.b16 %v79
  %v325 = vunpack.c.h.b16 %v79
  %v326 = vunpack.c.l.b16 %v80
  %v327 = vunpack.c.h.b16 %v80
  %v328 = vunpack.c.l.b16 %v81
  %v329 = vunpack.c.h.b16 %v81
  %v330 = vunpack.c.l.b16 %v82
  %v331 = vunpack.c.h.b16 %v82
  %v332 = vunpack.c.l.b16 %v83
  %v333 = vunpack.c.h.b16 %v83
  %v334 = vunpack.c.l.b16 %v84
  %v335 = vunpack.c.h.b16 %v84
  %v336 = vunpack.c.l.b16 %v85
  %v337 = vunpack.c.h.b16 %v85
  %v338 = vunpack.c.l.b16 %v86
  %v339 = vunpack.c.h.b16 %v86
  %v340 = vunpack.c.l.b16 %v87
  %v341 = vunpack.c.h.b16 %v87
  %v342 = vunpack.c.l.b16 %v88
  %v343 = vunpack.c.h.b16 %v88
  %v344 = vunpack.c.l.b16 %v89
  %v345 = vunpack.c.h.b16 %v89
  %v346 = vunpack.c.l.b16 %v90
  %v347 = vunpack.c.h.b16 %v90
  %v348 = vunpack.c.l.b16 %v91
  %v349 = vunpack.c.h.b16 %v91
  %v350 = vunpack.c.l.b16 %v92
  %v351 = vunpack.c.h.b16 %v92
  %v352 = vunpack.c.l.b16 %v93
  %v353 = vunpack.c.h.b16 %v93
  %v354 = vunpack.c.l.b16 %v94
  %v355 = vunpack.c.h.b16 %v94
  %v356 = vunpack.c.l.b16 %v95
  %v357 = vunpack.c.h.b16 %v95
  %v358 = vunpack.c.l.b16 %v96
  %v359 = vunpack.c.h.b16 %v96
  %v360 = vunpack.c.l.b16 %v97
  %v361 = vunpack.c.h.b16 %v97
  %v362 = vunpack.c.l.b16 %v98
  %v363 = vunpack.c.h.b16 %v98
  %v364 = vunpack.c.l.b16 %v99
  %v365 = vunpack.c.h.b16 %v99
  %v366 = vunpack.c.l.b16 %v100
  %v367 = vunpack.c.h.b16 %v100
  %v368 = vunpack.c.l.b16 %v101
  %v369 = vunpack.c.h.b16 %v101
  %v370 = vunpack.c.l.b16 %v102
  %v371 = vunpack.c.h.b16 %v102
  %v372 = vunpack.c.l.b16 %v103
  %v373 = vunpack.c.h.b16 %v103
  %v374 = vunpack.c.l.b16 %v104
  %v375 = vunpack.c.h.b16 %v104
  %v376 = vunpack.c.l.b16 %v105
  %v377 = vunpack.c.h.b16 %v105
  %v378 = vunpack.c.l.b16 %v106
  %v379 = vunpack.c.h.b16 %v106
  %v380 = vunpack.c.l.b16 %v107
  %v381 = vunpack.c.h.b16 %v107
  %v382 = vunpack.c.l.b16 %v108
  %v383 = vunpack.c.h.b16 %v108
  %v384 = vunpack.c.l.b16 %v109
  %v385 = vunpack.c.h.b16 %v109
  %v386 = vunpack.c.l.b16 %v110
  %v387 = vunpack.c.h.b16 %v110
  %v388 = vunpack.c.l.b16 %v111
  %v389 = vunpack.c.h.b16 %v111
  %v390 = vunpack.c.l.b16 %v112
  %v391 = vunpack.c.h.b16 %v112
  %v392 = vunpack.c.l.b16 %v113
  %v393 = vunpack.c.h.b16 %v113
  %v394 = vunpack.c.l.b16 %v114
  %v395 = vunpack.c.h.b16 %v114
  %v396 = vunpack.c.l.b16 %v115
  %v397 = vunpack.c.h.b16 %v115
  %v398 = vunpack.c.l.b16 %v116
  %v399 = vunpack.c.h.b16 %v116
  %v400 = vunpack.c.l.b16 %v117
  %v401 = vunpack.c.h.b16 %v117
  %v402 = vunpack.c.l.b16 %v118
  %v403 = vunpack.c.h.b16 %v118
  %v404 = vunpack.c.l.b16 %v119
  %v405 = vunpack.c.h.b16 %v119
  %v406 = vunpack.c.l.b16 %v120
  %v407 = vunpack.c.h.b16 %v120
  %v408 = vunpack.c.l.b16 %v121
  %v409 = vunpack.c.h.b16 %v121
  %v410 = vunpack.c.l.b16 %v122
  %v411 = vunpack.c.h.b16 %v122
  %v412 = vunpack.c.l.b16 %v123
  %v413 = vunpack.c.h.b16 %v123
  %v414 = vunpack.c.l.b16 %v124
  %v415 = vunpack.c.h.b16 %v124
  %v416 = vunpack.c.l.b16 %v125
  %v417 = vunpack.c.h.b16 %v125
  %v418 = vunpack.c.l.b16 %v126
  %v419 = vunpack.c.h.b16 %v126
  %v420 = vunpack.c.l.b16 %v127
  %v421 = vunpack.c.h.b16 %v127
  %v422 = vunpack.c.l.b16 %v128
  %v423 = vunpack.c.h.b16 %v128
  %v424 = vunpack.c.l.b16 %v129
  %v425 = vunpack.c.h.b16 %v129
  %v426 = vunpack.c.l.b16 %v130
  %v427 = vunpack.c.h.b16 %v130
  %v428 = vunpack.c.l.b16 %v131
  %v429 = vunpack.c.h.b16 %v131
  %v430 = vunpack.c.l.b16 %v132
  %v431 = vunpack.c.h.b16 %v132
  %v432 = vunpack.c.l.b16 %v133
  %v433 = vunpack.c.h.b16 %v133
  %v434 = vpack.c.b16 %v240, %v238
  %v435 = vpack.c.b16 %v241, %v239
  %v436 = vpack.c.b16 %v244, %v242
  %v437 = vpack.c.b16 %v245, %v243
  %v438 = vpack.c.b16 %v248, %v246
  %v439 = vpack.c.b16 %v249, %v247
  %v440 = vpack.c.b16 %v252, %v250
  %v441 = vpack.c.b16 %v253, %v251
  %v442 = vpack.c.b16 %v256, %v254
  %v443 = vpack.c.b16 %v257, %v255
  %v444 = vpack.c.b16 %v260, %v258
  %v445 = vpack.c.b16 %v261, %v259
  %v446 = vpack.c.b16 %v264, %v262
  %v447 = vpack.c.b16 %v265, %v263
  %v448 = vpack.c.b16 %v268, %v266
  %v449 = vpack.c.b16 %v269, %v267
  %v450 = vpack.c.b16 %v272, %v270
  %v451 = vpack.c.b16 %v273, %v271
  %v452 = vpack.c.b16 %v276, %v274
  %v453 = vpack.c.b16 %v277, %v275
  %v454 = vpack.c.b16 %v280, %v278
  %v455 = vpack.c.b16 %v281, %v279
  %v456 = vpack.c.b16 %v284, %v282
  %v457 = vpack.c.b16 %v285, %v283
  %v458 = vpack.c.b16 %v288, %v286
  %v459 = vpack.c.b16 %v289, %v287
  %v460 = vpack.c.b16 %v292, %v290
  %v461 = vpack.c.b16 %v293, %v291
  %v462 = vpack.c.b16 %v296, %v294
  %v463 = vpack.c.b16 %v297, %v295
  %v464 = vpack.c.b16 %v300, %v298
  %v465 = vpack.c.b16 %v301, %v299
  %v466 = vpack.c.b16 %v304, %v302
  %v467 = vpack.c.b16 %v305, %v303
  %v468 = vpack.c.b16 %v308, %v306
  %v469 = vpack.c.b16 %v309, %v307
  %v470 = vpack.c.b16 %v312, %v310
  %v471 = vpack.c.b16 %v313, %v311
  %v472 = vpack.c.b16 %v316, %v314
  %v473 = vpack.c.b16 %v317, %v315
  %v474 = vpack.c.b16 %v320, %v318
  %v475 = vpack.c.b16 %v321, %v319
  %v476 = vpack.c.b16 %v324, %v322
  %v477 = vpack.c.b16 %v325, %v323
  %v478 = vpack.c.b16 %v328, %v326
  %v479 = vpack.c.b16 %v329, %v327
  %v480 = vpack.c.b16 %v332, %v330
  %v481 = vpack.c.b16 %v333, %v331
  %v482 = vpack.c.b16 %v336, %v334
  %v483 = vpack.c.b16 %v337, %v335
  %v484 = vpack.c.b16 %v340, %v338
  %v485 = vpack.c.b16 %v341, %v339
  %v486 = vpack.c.b16 %v344, %v342
  %v487 = vpack.c.b16 %v345, %v343
  %v488 = vpack.c.b16 %v348, %v346
  %v489 = vpack.c.b16 %v349, %v347
  %v490 = vpack.c.b16 %v352, %v350
  %v491 = vpack.c.b16 %v353, %v351
  %v492 = vpack.c.b16 %v356, %v354
  %v493 = vpack.c.b16 %v357, %v355
  %v494 = vpack.c.b16 %v360, %v358
  %v495 = vpack.c.b16 %v361, %v359
  %v496 = vpack.c.b16 %v364, %v362
  %v497 = vpack.c.b16 %v365, %v363
  %v498 = vpack.c.b16 %v368, %v366
  %v499 = vpack.c.b16 %v369, %v367
  %v500 = vpack.c.b16 %v372, %v370
  %v501 = vpack.c.b16 %v373, %v371
  %v502 = vpack.c.b16 %v376, %v374
  %v503 = vpack.c.b16 %v377, %v375
  %v504 = vpack.c.b16 %v380, %v378
  %v505 = vpack.c.b16 %v381, %v379
  %v506 = vpack.c.b16 %v384, %v382
  %v507 = vpack.c.b16 %v385, %v383
  %v508 = vpack.c.b16 %v388, %v386
  %v509 = vpack.c.b16 %v389, %v387
  %v510 = vpack.c.b16 %v392, %v390
  %v511 = vpack.c.b16 %v393, %v391
  %v512 = vpack.c.b16 %v396, %v394
  %v513 = vpack.c.b16 %v397, %v395
  %v514 = vpack.c.b16 %v400, %v398
  %v515 = vpack.c.b16 %v401, %v399
  %v516 = vpack.c.b16 %v404, %v402
  %v517 = vpack.c.b16 %v405, %v403
  %v518 = vpack.c.b16 %v408, %v406
  %v519 = vpack.c.b16 %v409, %v407
  %v520 = vpack.c.b16 %v412, %v410
  %v521 = vpack.c.b16 %v413, %v411
  %v522 = vpack.c.b16 %v416, %v414
  %v523 = vpack.c.b16 %v417, %v415
  %v524 = vpack.c.b16 %v420, %v418
  %v525 = vpack.c.b16 %v421, %v419
  %v526 = vpack.c.b16 %v424, %v422
  %v527 = vpack.c.b16 %v425, %v423
  %v528 = vpack.c.b16 %v428, %v426
  %v529 = vpack.c.b16 %v429, %v427
  %v530 = vpack.c.b16 %v432, %v430
  %v531 = vpack.c.b16 %v433, %v431
  %vm630 = vcmask 130048
  %v632 = vsel %vm630, %v35, 0
  %634 = vmatpush.bf16.msra.mxu0 %v448
  %635 = vmatpush.bf16.msra.mxu0 %v446
  %636 = vmatpush.bf16.msra.mxu0 %v444
  %637 = vmatpush.bf16.msra.mxu0 %v442
  %638 = vmatpush.bf16.msra.mxu0 %v440
  %639 = vmatpush.bf16.msra.mxu0 %v438
  %640 = vmatpush.bf16.msra.mxu0 %v436
  %641 = vmatpush.bf16.msra.mxu0 %v434
  %642 = vmatmul.bf16.gmra.mxu0 %v29
  %v643 = vpop.f32.mrf.mxu0
  %v644 = vadd.f32 %v136, %v643
  %v645 = vpop.f32.mrf.mxu0
  %646 = vdwg.mxu0
  %647 = vmatpush.bf16.msra.mxu0 %v464
  %648 = vmatpush.bf16.msra.mxu0 %v462
  %649 = vmatpush.bf16.msra.mxu0 %v460
  %650 = vmatpush.bf16.msra.mxu0 %v458
  %651 = vmatpush.bf16.msra.mxu0 %v456
  %652 = vmatpush.bf16.msra.mxu0 %v454
  %653 = vmatpush.bf16.msra.mxu0 %v452
  %654 = vmatpush.bf16.msra.mxu0 %v450
  %655 = vmatmul.bf16.gmra.mxu0 %v30
  %v656 = vpop.f32.mrf.mxu0
  %v657 = vadd.f32 %v644, %v656
  %v658 = vpop.f32.mrf.mxu0
  %659 = vdwg.mxu0
  %660 = vmatpush.bf16.msra.mxu0 %v480
  %661 = vmatpush.bf16.msra.mxu0 %v478
  %662 = vmatpush.bf16.msra.mxu0 %v476
  %663 = vmatpush.bf16.msra.mxu0 %v474
  %664 = vmatpush.bf16.msra.mxu0 %v472
  %665 = vmatpush.bf16.msra.mxu0 %v470
  %666 = vmatpush.bf16.msra.mxu0 %v468
  %667 = vmatpush.bf16.msra.mxu0 %v466
  %668 = vmatmul.bf16.gmra.mxu0 %v31
  %v669 = vpop.f32.mrf.mxu0
  %v670 = vadd.f32 %v657, %v669
  %v671 = vpop.f32.mrf.mxu0
  %672 = vdwg.mxu0
  %673 = vmatpush.bf16.msra.mxu0 %v496
  %674 = vmatpush.bf16.msra.mxu0 %v494
  %675 = vmatpush.bf16.msra.mxu0 %v492
  %676 = vmatpush.bf16.msra.mxu0 %v490
  %677 = vmatpush.bf16.msra.mxu0 %v488
  %678 = vmatpush.bf16.msra.mxu0 %v486
  %679 = vmatpush.bf16.msra.mxu0 %v484
  %680 = vmatpush.bf16.msra.mxu0 %v482
  %681 = vmatmul.bf16.gmra.mxu0 %v32
  %v682 = vpop.f32.mrf.mxu0
  %v683 = vadd.f32 %v670, %v682
  %v684 = vpop.f32.mrf.mxu0
  %685 = vdwg.mxu0
  %686 = vmatpush.bf16.msra.mxu0 %v512
  %687 = vmatpush.bf16.msra.mxu0 %v510
  %688 = vmatpush.bf16.msra.mxu0 %v508
  %689 = vmatpush.bf16.msra.mxu0 %v506
  %690 = vmatpush.bf16.msra.mxu0 %v504
  %691 = vmatpush.bf16.msra.mxu0 %v502
  %692 = vmatpush.bf16.msra.mxu0 %v500
  %693 = vmatpush.bf16.msra.mxu0 %v498
  %694 = vmatmul.bf16.gmra.mxu0 %v33
  %v695 = vpop.f32.mrf.mxu0
  %v696 = vadd.f32 %v683, %v695
  %v697 = vpop.f32.mrf.mxu0
  %698 = vdwg.mxu0
  %699 = vmatpush.bf16.msra.mxu0 %v528
  %700 = vmatpush.bf16.msra.mxu0 %v526
  %701 = vmatpush.bf16.msra.mxu0 %v524
  %702 = vmatpush.bf16.msra.mxu0 %v522
  %703 = vmatpush.bf16.msra.mxu0 %v520
  %704 = vmatpush.bf16.msra.mxu0 %v518
  %705 = vmatpush.bf16.msra.mxu0 %v516
  %706 = vmatpush.bf16.msra.mxu0 %v514
  %707 = vmatmul.bf16.gmra.mxu0 %v34
  %v708 = vpop.f32.mrf.mxu0
  %v709 = vadd.f32 %v696, %v708
  %v710 = vpop.f32.mrf.mxu0
  %711 = vdwg.mxu0
  %712 = vmatpush.bf16.msra.mxu0 0
  %713 = vmatpush.bf16.msra.mxu0 0
  %714 = vmatpush.bf16.msra.mxu0 0
  %715 = vmatpush.bf16.msra.mxu0 0
  %716 = vmatpush.bf16.msra.mxu0 0
  %717 = vmatpush.bf16.msra.mxu0 0
  %718 = vmatpush.bf16.msra.mxu0 0
  %719 = vmatpush.bf16.msra.mxu0 %v530
  %720 = vmatmul.bf16.gmra.mxu0 %v632
  %v721 = vpop.f32.mrf.mxu0
  %v722 = vadd.f32 %v709, %v721
  %v723 = vpop.f32.mrf.mxu0
  %724 = vdwg.mxu0
  %725 = vmatpush.bf16.msra.mxu0 %v449
  %726 = vmatpush.bf16.msra.mxu0 %v447
  %727 = vmatpush.bf16.msra.mxu0 %v445
  %728 = vmatpush.bf16.msra.mxu0 %v443
  %729 = vmatpush.bf16.msra.mxu0 %v441
  %730 = vmatpush.bf16.msra.mxu0 %v439
  %731 = vmatpush.bf16.msra.mxu0 %v437
  %732 = vmatpush.bf16.msra.mxu0 %v435
  %733 = vmatmul.bf16.gmra.mxu0 %v29
  %v734 = vpop.f32.mrf.mxu0
  %v735 = vadd.f32 %v137, %v734
  %v736 = vpop.f32.mrf.mxu0
  %737 = vdwg.mxu0
  %738 = vmatpush.bf16.msra.mxu0 %v465
  %739 = vmatpush.bf16.msra.mxu0 %v463
  %740 = vmatpush.bf16.msra.mxu0 %v461
  %741 = vmatpush.bf16.msra.mxu0 %v459
  %742 = vmatpush.bf16.msra.mxu0 %v457
  %743 = vmatpush.bf16.msra.mxu0 %v455
  %744 = vmatpush.bf16.msra.mxu0 %v453
  %745 = vmatpush.bf16.msra.mxu0 %v451
  %746 = vmatmul.bf16.gmra.mxu0 %v30
  %v747 = vpop.f32.mrf.mxu0
  %v748 = vadd.f32 %v735, %v747
  %v749 = vpop.f32.mrf.mxu0
  %750 = vdwg.mxu0
  %751 = vmatpush.bf16.msra.mxu0 %v481
  %752 = vmatpush.bf16.msra.mxu0 %v479
  %753 = vmatpush.bf16.msra.mxu0 %v477
  %754 = vmatpush.bf16.msra.mxu0 %v475
  %755 = vmatpush.bf16.msra.mxu0 %v473
  %756 = vmatpush.bf16.msra.mxu0 %v471
  %757 = vmatpush.bf16.msra.mxu0 %v469
  %758 = vmatpush.bf16.msra.mxu0 %v467
  %759 = vmatmul.bf16.gmra.mxu0 %v31
  %v760 = vpop.f32.mrf.mxu0
  %v761 = vadd.f32 %v748, %v760
  %v762 = vpop.f32.mrf.mxu0
  %763 = vdwg.mxu0
  %764 = vmatpush.bf16.msra.mxu0 %v497
  %765 = vmatpush.bf16.msra.mxu0 %v495
  %766 = vmatpush.bf16.msra.mxu0 %v493
  %767 = vmatpush.bf16.msra.mxu0 %v491
  %768 = vmatpush.bf16.msra.mxu0 %v489
  %769 = vmatpush.bf16.msra.mxu0 %v487
  %770 = vmatpush.bf16.msra.mxu0 %v485
  %771 = vmatpush.bf16.msra.mxu0 %v483
  %772 = vmatmul.bf16.gmra.mxu0 %v32
  %v773 = vpop.f32.mrf.mxu0
  %v774 = vadd.f32 %v761, %v773
  %v775 = vpop.f32.mrf.mxu0
  %776 = vdwg.mxu0
  %777 = vmatpush.bf16.msra.mxu0 %v513
  %778 = vmatpush.bf16.msra.mxu0 %v511
  %779 = vmatpush.bf16.msra.mxu0 %v509
  %780 = vmatpush.bf16.msra.mxu0 %v507
  %781 = vmatpush.bf16.msra.mxu0 %v505
  %782 = vmatpush.bf16.msra.mxu0 %v503
  %783 = vmatpush.bf16.msra.mxu0 %v501
  %784 = vmatpush.bf16.msra.mxu0 %v499
  %785 = vmatmul.bf16.gmra.mxu0 %v33
  %v786 = vpop.f32.mrf.mxu0
  %v787 = vadd.f32 %v774, %v786
  %v788 = vpop.f32.mrf.mxu0
  %789 = vdwg.mxu0
  %790 = vmatpush.bf16.msra.mxu0 %v529
  %791 = vmatpush.bf16.msra.mxu0 %v527
  %792 = vmatpush.bf16.msra.mxu0 %v525
  %793 = vmatpush.bf16.msra.mxu0 %v523
  %794 = vmatpush.bf16.msra.mxu0 %v521
  %795 = vmatpush.bf16.msra.mxu0 %v519
  %796 = vmatpush.bf16.msra.mxu0 %v517
  %797 = vmatpush.bf16.msra.mxu0 %v515
  %798 = vmatmul.bf16.gmra.mxu0 %v34
  %v799 = vpop.f32.mrf.mxu0
  %v800 = vadd.f32 %v787, %v799
  %v801 = vpop.f32.mrf.mxu0
  %802 = vdwg.mxu0
  %803 = vmatpush.bf16.msra.mxu0 0
  %804 = vmatpush.bf16.msra.mxu0 0
  %805 = vmatpush.bf16.msra.mxu0 0
  %806 = vmatpush.bf16.msra.mxu0 0
  %807 = vmatpush.bf16.msra.mxu0 0
  %808 = vmatpush.bf16.msra.mxu0 0
  %809 = vmatpush.bf16.msra.mxu0 0
  %810 = vmatpush.bf16.msra.mxu0 %v531
  %811 = vmatmul.bf16.gmra.mxu0 %v632
  %v812 = vpop.f32.mrf.mxu0
  %v813 = vadd.f32 %v800, %v812
  %v814 = vpop.f32.mrf.mxu0
  %815 = vdwg.mxu0
  %vm816 = vcmp.gt.f32.partialorder %v722, 0.0
  %vm817 = vcmp.gt.f32.partialorder %v813, 0.0
  %v818 = vmul.f32 %v722, 0.02
  %v819 = vmul.f32 %v813, 0.02
  %v820 = vsel %vm816, %v722, %v818
  %v821 = vsel %vm817, %v813, %v819
  %vm822 = vcmask 588800
  %v823 = vsel %vm822, %v821, 0.0
  %v824 = vadd.f32 %v820, %v823
  %825 = vadd.xlane.f32.xlu0 %v824
  %v826 = vpop.xlane.xlu0 %825
  %v827 = vrcp.pop 200.0
  %v828 = vmul.f32 200.0, %v827
  %v829 = vsub.f32 1.0, %v828
  %v830 = vmul.f32 %v827, %v829
  %v831 = vadd.f32 %v827, %v830
  %vm832 = vweird.f32 %v827
  %v833 = vsel %vm832, %v827, %v831
  %v834 = vmul.f32 %v826, %v833
  %v835 = vsub.f32 %v820, %v834
  %v836 = vsub.f32 %v821, %v834
  %v837 = vmul.f32 %v835, %v835
  %v838 = vmul.f32 %v836, %v836
  %v839 = vsel %vm822, %v838, 0.0
  %v840 = vadd.f32 %v837, %v839
  %841 = vadd.xlane.f32.xlu0 %v840
  %v842 = vpop.xlane.xlu0 %841
  %v843 = vmul.f32 %v842, %v833
  %v844 = vld [vmem:[%s3] sm:$0x3]
  %v846 = vperm.slane %v844, 0
  %v847 = vperm.slane %v844, 1
  %v850 = vmul.f32 %v835, %v846
  %v851 = vmul.f32 %v836, %v847
  %v852 = vsel %vm822, %v851, 0.0
  %v853 = vadd.f32 %v850, %v852
  %854 = vadd.xlane.f32.xlu0 %v853
  %v855 = vpop.xlane.xlu0 %854
  %v856 = vadd.f32 %v843, 1e-05
  %v857 = vrsqrt.pop %v856
  %v858 = vmul.f32 %v857, %v856
  %v859 = vmul.f32 %v858, %v857
  %v860 = vmul.f32 0.5, %v859
  %v861 = vsub.f32 1.5, %v860
  %v862 = vmul.f32 %v857, %v861
  %vm863 = vweird.f32 %v856
  %vm864 = vweird.f32 %v857
  %vm865 = vmor %vm863, %vm864
  %v866 = vsel %vm865, %v857, %v862
  %v867 = vmul.f32 %v866, %v855
  %s868 = sld [smem:[#allocation2]]
  %v869 = vstv %s868
  %v870 = vadd.f32 %v867, %v869
  %v871 = vxor.u32 %v870, 2147483648
  %v872 = vmul.f32 %v871, 1.442695
  %v873 = vpow.pop %v872
  %v874 = vadd.f32 %v873, 1.0
  %v875 = vrcp.pop %v874
  %v876 = vmul.f32 %v874, %v875
  %v877 = vsub.f32 1.0, %v876
  %v878 = vmul.f32 %v875, %v877
  %v879 = vadd.f32 %v875, %v878
  %vm880 = vweird.f32 %v874
  %vm881 = vweird.f32 %v875
  %vm882 = vmor %vm880, %vm881
  %v883 = vsel %vm882, %v875, %v879
  %v884 = vand.u32 2147483647, %v874
  %vm885 = vcmp.eq.f32.partialorder %v884, 8.507059e+37
  %v886 = vand.u32 %v874, 2147483648
  %v887 = vor.u32 1.1754944e-38, %v886
  %v888 = vsel %vm885, %v887, %v883
  %v889 = vmul.f32 1.0, %v888
  %vm890 = vcmask 7168
  %891 = vst.msk [vmem:[%s5] sm:$0xff] %vm890, %v889
  // Predicated region
  $region22: #{tpu_custom_call.1} parent=0 // pred_check
    _
  $region23: #{tpu_custom_call.1} parent=0 // pred_check_branch
    %893 = sbr.rel (0) target = $region25
  $region24: #{tpu_custom_call.1} parent=0 // pred_region
    _
  $region25: #{tpu_custom_call.1} parent=0 // pred_fallthru
    _
  // Predicated region
  $region26: #{tpu_custom_call.1} parent=0 // pred_check
    _
  $region27: #{tpu_custom_call.1} parent=0 // pred_check_branch
    %895 = sbr.rel (0) target = $region29
  $region28: #{tpu_custom_call.1} parent=0 // pred_region
    _
  $region29: #{tpu_custom_call.1} parent=0 // pred_fallthru
    _

</llo_original>
